<compile_context>
chip_gen: v7x
topology: tpu7x:2x2x1
jax: 0.10.0
libtpu: 0.0.40
codegen_flags: <defaults>
</compile_context>

<pallas_src>
import functools
import math

import jax
import jax.numpy as jnp
from jax.experimental import pallas as pl
from jax.experimental.pallas import tpu as pltpu


def atten_kernel(xp_ref, w_ref, b_ref, adj_ref, vprime_ref, atten_ref,
                 *, batch, n_nodes, e_dim):
    """Single invocation processes every batch.

    xp_ref:     (B*N, S)  x permuted (0,2,1) and flattened in the wrapper
    w_ref:      (S, 3E)   fused [Wq^T | Wk^T | Wv^T]   (un-batched)
    b_ref:      (1, 3E)   fused [bq | bk | bv]
    adj_ref:    (N, N)    adjacency (mask built in-kernel with jnp.where)
    vprime_ref: (B, N, E) output V_prime
    atten_ref:  (B, N, N) output attention
    """
    scale = jnp.float32(1.0 / math.sqrt(512.0))   # torch hardcodes sqrt(512)
    neg_big = jnp.float32(-9.0e15)

    # One fused QKV projection for ALL batches: (B*N, S) @ (S, 3E).
    qkv = jnp.dot(xp_ref[...], w_ref[...],
                  preferred_element_type=jnp.float32) + b_ref[...]
    adj = adj_ref[...]

    # B is tiny and static -> unrolled; everything below is 2-D per batch.
    for b in range(batch):
        r0 = b * n_nodes
        q = qkv[r0:r0 + n_nodes, 0:e_dim]
        k = qkv[r0:r0 + n_nodes, e_dim:2 * e_dim]
        v = qkv[r0:r0 + n_nodes, 2 * e_dim:3 * e_dim]

        # E = Q @ K^T  (contract last dims -> no in-kernel transpose of K)
        logits = jnp.einsum("ne,me->nm", q, k,
                            preferred_element_type=jnp.float32)
        # Exact torch.where(adj > 0, E, -9e15) semantics (also handles a
        # fully-masked column the same way torch does).
        logits = jnp.where(adj > 0, logits, neg_big)

        # softmax over torch dim=1  == axis 0 of the per-batch (N, N) tile
        m = jnp.max(logits, axis=0, keepdims=True)
        p = jnp.exp(logits - m)
        s = jnp.sum(p, axis=0, keepdims=True)
        atten = p / s                      # exact divide: atten is returned

        atten_ref[b, :, :] = atten
        # Apply 1/sqrt(512) on the result (NOT folded into the weights) so the
        # projection sees bit-identical weights to the reference.
        vprime_ref[b, :, :] = (
            jnp.dot(atten, v, preferred_element_type=jnp.float32) * scale)


def fuse_qkv_params(wq, bq, wk, bk, wv, bv):
    """Static per-model prep: compute once and cache between calls."""
    w_qkv = jnp.concatenate([wq.T, wk.T, wv.T], axis=1).astype(jnp.float32)  # (S, 3E)
    b_qkv = jnp.concatenate([bq, bk, bv]).reshape(1, -1).astype(jnp.float32)  # (1, 3E)
    return w_qkv, b_qkv


@jax.jit
def atten_forward(x, adj, w_qkv, b_qkv):
    """x: (B, S, N) f32, adj: (N, N), fused params from fuse_qkv_params.

    Returns (V_prime (B, N, E), atten (B, N, N)), matching the torch module.
    """
    B, S, N = x.shape
    E = w_qkv.shape[1] // 3

    # Flatten to (B*N, S): the QKV projection becomes ONE un-batched 2-D
    # matmul against the (S, 3E) weight.  Under jit this transpose+reshape is
    # a single tiny fusion inside the same executable as the pallas_call.
    xp = jnp.transpose(x, (0, 2, 1)).reshape(B * N, S).astype(jnp.float32)

    vmem = lambda: pl.BlockSpec(memory_space=pltpu.MemorySpace.VMEM)

    kernel = functools.partial(atten_kernel, batch=B, n_nodes=N, e_dim=E)
    # No grid: whole-array VMEM blocks, single invocation.
    v_prime, atten = pl.pallas_call(
        kernel,
        out_shape=(
            jax.ShapeDtypeStruct((B, N, E), jnp.float32),   # V_prime
            jax.ShapeDtypeStruct((B, N, N), jnp.float32),   # atten
        ),
        in_specs=[vmem(), vmem(), vmem(), vmem()],
        out_specs=(vmem(), vmem()),
    )(xp, w_qkv, b_qkv, adj.astype(jnp.float32))
    return v_prime, atten


def atten_layer(x, adj, wq, bq, wk, bk, wv, bv):
    """Convenience wrapper with the full torch-module signature."""
    w_qkv, b_qkv = fuse_qkv_params(wq, bq, wk, bk, wv, bv)
    return atten_forward(x, adj, w_qkv, b_qkv)


def atten_layer_ref(x, adj, wq, bq, wk, bk, wv, bv):
    """Pure-JAX reference mirroring the PyTorch forward exactly."""
    xp = jnp.transpose(x, (0, 2, 1))                    # (B, N, S)
    q = xp @ wq.T + bq
    k = xp @ wk.T + bk
    v = xp @ wv.T + bv
    e = jnp.einsum("bne,bme->bnm", q, k)
    e = jnp.where(adj > 0, e, jnp.full_like(e, -9.0e15))
    atten = jax.nn.softmax(e, axis=1)                   # dim=1 in torch
    v_prime = jnp.einsum("bnm,bme->bne", atten, v) / math.sqrt(512.0)
    return v_prime, atten


if __name__ == "__main__":
    # Shapes implied by the module: x (batch, seq_len, node); Linear over seq_len.
    B, S, N, E = 2, 8, 16, 32          # input_size=S=8, embed_size=E=32

    key = jax.random.PRNGKey(0)
    kx, kadj, kwq, kbq, kwk, kbk, kwv, kbv = jax.random.split(key, 8)

    x = jax.random.normal(kx, (B, S, N), dtype=jnp.float32)
    # random sparse-ish adjacency with self-loops so no column is fully masked
    adj = (jax.random.uniform(kadj, (N, N)) > 0.5).astype(jnp.float32)
    adj = jnp.maximum(adj, jnp.eye(N, dtype=jnp.float32))

    bound = 1.0 / math.sqrt(S)          # PyTorch Linear default init range
    wq = jax.random.uniform(kwq, (E, S), minval=-bound, maxval=bound)
    bq = jax.random.uniform(kbq, (E,), minval=-bound, maxval=bound)
    wk = jax.random.uniform(kwk, (E, S), minval=-bound, maxval=bound)
    bk = jax.random.uniform(kbk, (E,), minval=-bound, maxval=bound)
    wv = jax.random.uniform(kwv, (E, S), minval=-bound, maxval=bound)
    bv = jax.random.uniform(kbv, (E,), minval=-bound, maxval=bound)

    # Static prep computed once (cacheable across calls), then the jitted
    # pallas forward.
    w_qkv, b_qkv = fuse_qkv_params(wq, bq, wk, bk, wv, bv)
    v_prime, atten = atten_forward(x, adj, w_qkv, b_qkv)
    jax.block_until_ready((v_prime, atten))

    v_ref, a_ref = atten_layer_ref(x, adj, wq, bq, wk, bk, wv, bv)

    # atten: exact-divide softmax over identical weight bits -> tight match.
    assert jnp.allclose(atten, a_ref, rtol=5e-3, atol=1e-5), \
        float(jnp.max(jnp.abs(atten - a_ref)))
    # v_prime: signed sums with cancellation; allow a small absolute cushion
    # for MXU operand-rounding differences accumulated over the N-term sum.
    assert jnp.allclose(v_prime, v_ref, rtol=5e-3, atol=5e-4), \
        float(jnp.max(jnp.abs(v_prime - v_ref)))

    print("KERNEL_OK")
</pallas_src>

<mosaic_0001>
module attributes {stable_mosaic.version = 11 : i64} {
  func.func @atten_kernel(%arg0: memref<32x8xf32, #tpu.memory_space<vmem>>, %arg1: memref<8x96xf32, #tpu.memory_space<vmem>>, %arg2: memref<1x96xf32, #tpu.memory_space<vmem>>, %arg3: memref<16x16xf32, #tpu.memory_space<vmem>>, %arg4: memref<2x16x32xf32, #tpu.memory_space<vmem>>, %arg5: memref<2x16x16xf32, #tpu.memory_space<vmem>>) attributes {dimension_semantics = [], scalar_prefetch = 0 : i64, scratch_operands = 0 : i64, tpu.core_type = #tpu.core_type<tc>} {
    %c0 = arith.constant 0 : index
    %c0_0 = arith.constant 0 : index
    %0 = vector.load %arg0[%c0, %c0_0] : memref<32x8xf32, #tpu.memory_space<vmem>>, vector<32x8xf32>
    %c0_1 = arith.constant 0 : index
    %c0_2 = arith.constant 0 : index
    %1 = vector.load %arg1[%c0_1, %c0_2] : memref<8x96xf32, #tpu.memory_space<vmem>>, vector<8x96xf32>
    %cst = arith.constant dense<0.000000e+00> : vector<32x96xf32>
    %2 = tpu.matmul %0, %1, %cst {dimension_numbers = #tpu.dot_dimension_numbers<[1], [0], [0], [1], [0, 0, 1, 1], [], []>} : vector<32x8xf32>, vector<8x96xf32>, vector<32x96xf32> -> vector<32x96xf32>
    %c0_3 = arith.constant 0 : index
    %c0_4 = arith.constant 0 : index
    %3 = vector.load %arg2[%c0_3, %c0_4] : memref<1x96xf32, #tpu.memory_space<vmem>>, vector<1x96xf32>
    %4 = vector.broadcast %3 : vector<1x96xf32> to vector<32x96xf32>
    %5 = arith.addf %2, %4 : vector<32x96xf32>
    %c0_5 = arith.constant 0 : index
    %c0_6 = arith.constant 0 : index
    %6 = vector.load %arg3[%c0_5, %c0_6] : memref<16x16xf32, #tpu.memory_space<vmem>>, vector<16x16xf32>
    %7 = vector.extract_strided_slice %5 {offsets = [0, 0], sizes = [16, 32], strides = [1, 1]} : vector<32x96xf32> to vector<16x32xf32>
    %8 = vector.extract_strided_slice %5 {offsets = [0, 32], sizes = [16, 32], strides = [1, 1]} : vector<32x96xf32> to vector<16x32xf32>
    %9 = vector.extract_strided_slice %5 {offsets = [0, 64], sizes = [16, 32], strides = [1, 1]} : vector<32x96xf32> to vector<16x32xf32>
    "tpu.trace_start"() <{level = 10 : i32, message = "ne,me->nm"}> : () -> ()
    %cst_7 = arith.constant dense<0.000000e+00> : vector<16x16xf32>
    %10 = tpu.matmul %7, %8, %cst_7 {dimension_numbers = #tpu.dot_dimension_numbers<[1], [1], [0], [0], [0, 0, 1, 0], [], []>} : vector<16x32xf32>, vector<16x32xf32>, vector<16x16xf32> -> vector<16x16xf32>
    %cst_8 = arith.constant 0.000000e+00 : f32
    "tpu.trace_stop"() : () -> ()
    %11 = vector.broadcast %cst_8 : f32 to vector<16x16xf32>
    %12 = arith.cmpf ogt, %6, %11 : vector<16x16xf32>
    %cst_9 = arith.constant -9.000000e+15 : f32
    %13 = vector.broadcast %cst_9 : f32 to vector<16x16xf32>
    %14 = arith.select %12, %10, %13 : vector<16x16xi1>, vector<16x16xf32>
    %cst_10 = arith.constant dense<0xFF800000> : vector<16xf32>
    %15 = vector.multi_reduction <maximumf>, %14, %cst_10 [0] : vector<16x16xf32> to vector<16xf32>
    %16 = vector.shape_cast %15 : vector<16xf32> to vector<1x16xf32>
    %17 = vector.broadcast %16 : vector<1x16xf32> to vector<16x16xf32>
    %18 = arith.subf %14, %17 : vector<16x16xf32>
    %19 = math.exp %18 : vector<16x16xf32>
    %cst_11 = arith.constant dense<0.000000e+00> : vector<16xf32>
    %20 = vector.multi_reduction <add>, %19, %cst_11 [0] : vector<16x16xf32> to vector<16xf32>
    %21 = vector.shape_cast %20 : vector<16xf32> to vector<1x16xf32>
    %22 = vector.broadcast %21 : vector<1x16xf32> to vector<16x16xf32>
    %23 = arith.divf %19, %22 : vector<16x16xf32>
    %c0_12 = arith.constant 0 : index
    %c0_13 = arith.constant 0 : index
    %c0_14 = arith.constant 0 : index
    %24 = vector.load %arg5[%c0_12, %c0_13, %c0_14] : memref<2x16x16xf32, #tpu.memory_space<vmem>>, vector<1x16x16xf32>
    %25 = vector.shape_cast %24 : vector<1x16x16xf32> to vector<16x16xf32>
    %26 = vector.shape_cast %23 : vector<16x16xf32> to vector<1x16x16xf32>
    tpu.vector_store %arg5[%c0_12, %c0_13, %c0_14], %26 {strides = array<i32>} : memref<2x16x16xf32, #tpu.memory_space<vmem>>, vector<1x16x16xf32>,
    %cst_15 = arith.constant dense<0.000000e+00> : vector<16x32xf32>
    %27 = tpu.matmul %23, %9, %cst_15 {dimension_numbers = #tpu.dot_dimension_numbers<[1], [0], [0], [1], [0, 0, 1, 1], [], []>} : vector<16x16xf32>, vector<16x32xf32>, vector<16x32xf32> -> vector<16x32xf32>
    %cst_16 = arith.constant 0.0441941731 : f32
    %28 = vector.broadcast %cst_16 : f32 to vector<16x32xf32>
    %29 = arith.mulf %27, %28 : vector<16x32xf32>
    %c0_17 = arith.constant 0 : index
    %c0_18 = arith.constant 0 : index
    %c0_19 = arith.constant 0 : index
    %30 = vector.load %arg4[%c0_17, %c0_18, %c0_19] : memref<2x16x32xf32, #tpu.memory_space<vmem>>, vector<1x16x32xf32>
    %31 = vector.shape_cast %30 : vector<1x16x32xf32> to vector<16x32xf32>
    %32 = vector.shape_cast %29 : vector<16x32xf32> to vector<1x16x32xf32>
    tpu.vector_store %arg4[%c0_17, %c0_18, %c0_19], %32 {strides = array<i32>} : memref<2x16x32xf32, #tpu.memory_space<vmem>>, vector<1x16x32xf32>,
    %33 = vector.extract_strided_slice %5 {offsets = [16, 0], sizes = [16, 32], strides = [1, 1]} : vector<32x96xf32> to vector<16x32xf32>
    %34 = vector.extract_strided_slice %5 {offsets = [16, 32], sizes = [16, 32], strides = [1, 1]} : vector<32x96xf32> to vector<16x32xf32>
    %35 = vector.extract_strided_slice %5 {offsets = [16, 64], sizes = [16, 32], strides = [1, 1]} : vector<32x96xf32> to vector<16x32xf32>
    "tpu.trace_start"() <{level = 10 : i32, message = "ne,me->nm"}> : () -> ()
    %cst_20 = arith.constant dense<0.000000e+00> : vector<16x16xf32>
    %36 = tpu.matmul %33, %34, %cst_20 {dimension_numbers = #tpu.dot_dimension_numbers<[1], [1], [0], [0], [0, 0, 1, 0], [], []>} : vector<16x32xf32>, vector<16x32xf32>, vector<16x16xf32> -> vector<16x16xf32>
    %cst_21 = arith.constant 0.000000e+00 : f32
    "tpu.trace_stop"() : () -> ()
    %37 = vector.broadcast %cst_21 : f32 to vector<16x16xf32>
    %38 = arith.cmpf ogt, %6, %37 : vector<16x16xf32>
    %cst_22 = arith.constant -9.000000e+15 : f32
    %39 = vector.broadcast %cst_22 : f32 to vector<16x16xf32>
    %40 = arith.select %38, %36, %39 : vector<16x16xi1>, vector<16x16xf32>
    %cst_23 = arith.constant dense<0xFF800000> : vector<16xf32>
    %41 = vector.multi_reduction <maximumf>, %40, %cst_23 [0] : vector<16x16xf32> to vector<16xf32>
    %42 = vector.shape_cast %41 : vector<16xf32> to vector<1x16xf32>
    %43 = vector.broadcast %42 : vector<1x16xf32> to vector<16x16xf32>
    %44 = arith.subf %40, %43 : vector<16x16xf32>
    %45 = math.exp %44 : vector<16x16xf32>
    %cst_24 = arith.constant dense<0.000000e+00> : vector<16xf32>
    %46 = vector.multi_reduction <add>, %45, %cst_24 [0] : vector<16x16xf32> to vector<16xf32>
    %47 = vector.shape_cast %46 : vector<16xf32> to vector<1x16xf32>
    %48 = vector.broadcast %47 : vector<1x16xf32> to vector<16x16xf32>
    %49 = arith.divf %45, %48 : vector<16x16xf32>
    %c1 = arith.constant 1 : index
    %c0_25 = arith.constant 0 : index
    %c0_26 = arith.constant 0 : index
    %50 = vector.load %arg5[%c1, %c0_25, %c0_26] : memref<2x16x16xf32, #tpu.memory_space<vmem>>, vector<1x16x16xf32>
    %51 = vector.shape_cast %50 : vector<1x16x16xf32> to vector<16x16xf32>
    %52 = vector.shape_cast %49 : vector<16x16xf32> to vector<1x16x16xf32>
    tpu.vector_store %arg5[%c1, %c0_25, %c0_26], %52 {strides = array<i32>} : memref<2x16x16xf32, #tpu.memory_space<vmem>>, vector<1x16x16xf32>,
    %cst_27 = arith.constant dense<0.000000e+00> : vector<16x32xf32>
    %53 = tpu.matmul %49, %35, %cst_27 {dimension_numbers = #tpu.dot_dimension_numbers<[1], [0], [0], [1], [0, 0, 1, 1], [], []>} : vector<16x16xf32>, vector<16x32xf32>, vector<16x32xf32> -> vector<16x32xf32>
    %cst_28 = arith.constant 0.0441941731 : f32
    %54 = vector.broadcast %cst_28 : f32 to vector<16x32xf32>
    %55 = arith.mulf %53, %54 : vector<16x32xf32>
    %c1_29 = arith.constant 1 : index
    %c0_30 = arith.constant 0 : index
    %c0_31 = arith.constant 0 : index
    %56 = vector.load %arg4[%c1_29, %c0_30, %c0_31] : memref<2x16x32xf32, #tpu.memory_space<vmem>>, vector<1x16x32xf32>
    %57 = vector.shape_cast %56 : vector<1x16x32xf32> to vector<16x32xf32>
    %58 = vector.shape_cast %55 : vector<16x32xf32> to vector<1x16x32xf32>
    tpu.vector_store %arg4[%c1_29, %c0_30, %c0_31], %58 {strides = array<i32>} : memref<2x16x32xf32, #tpu.memory_space<vmem>>, vector<1x16x32xf32>,
    return
  }
}

</mosaic_0001>

<llo_original>
// kernel: atten_forward.1
$region0: #{atten_forward.1}
  #allocation0 [shape = 'u32[]', space=smem, size = 0x4, offset = 0x4, fixed_abs, tag = 'smem constant byte address 0x4 - core index']
  #allocation1 [shape = 'u32[144,128]{1,0:T(1,128)}', space=vmem, size = 0x12000, scoped, tag = 'internal scratch']
  %s0 = inlined_call_operand.vmem [shape: f32[32,8], index: 0, kind: input, shape index: {}]
  %s1 = inlined_call_operand.vmem [shape: f32[8,96], index: 1, kind: input, shape index: {}]
  %s2 = inlined_call_operand.vmem [shape: f32[1,96], index: 2, kind: input, shape index: {}]
  %s3 = inlined_call_operand.vmem [shape: f32[16,16], index: 3, kind: input, shape index: {}]
  %s4 = inlined_call_operand.hbm [shape: f32[2,16,32], index: 4, kind: output, shape index: {0}]
  %s5 = inlined_call_operand.hbm [shape: f32[2,16,16], index: 5, kind: output, shape index: {1}]
  %6 = xla_tuple %s4, %s5
  %s7 = sld [smem:[#allocation0]]
  $region34: #{atten_forward.1} parent=0
    _
  %s9 = ssub.s32 1, %s7
  %s10 = scalar_select 0, %s9, %s7
  $region1: #{atten_forward.1} parent=0
    #allocation2 [shape = 'u8[16384]{0}', space=vmem, size = 0x4000, scoped, tag = 'output window, operand 0, single buffered']
    #allocation3 [shape = 's32[1]{0}', space=sflag, size = 0x4, scoped, tag = 'scoped memory for atten_forward.1']
    #allocation4 [shape = 'u8[16384]{0}', space=vmem, size = 0x4000, scoped, tag = 'output window, operand 1, single buffered']
    #allocation5 [shape = 's32[1]{0}', space=sflag, size = 0x4, scoped, tag = 'scoped memory for atten_forward.1']
    %11 = vsyncpa [#allocation3], 0
    %12 = vsyncpa [#allocation5], 0
    // Predicated region
    $region2: #{atten_forward.1} parent=1 // pred_check
      _
    $region3: #{atten_forward.1} parent=1 // pred_check_branch
      %14 = sbr.rel (0) target = $region5
    $region4: #{atten_forward.1} parent=1 // pred_region
      _
    $region5: #{atten_forward.1} parent=1 // pred_fallthru
      _
    // Predicated region
    $region6: #{atten_forward.1} parent=1 // pred_check
      _
    $region7: #{atten_forward.1} parent=1 // pred_check_branch
      %16 = sbr.rel (0) target = $region9
    $region8: #{atten_forward.1} parent=1 // pred_region
      _
    $region9: #{atten_forward.1} parent=1 // pred_fallthru
      _
    // Predicated region
    $region10: #{atten_forward.1} parent=1 // pred_check
      _
    $region11: #{atten_forward.1} parent=1 // pred_check_branch
      %18 = sbr.rel (0) target = $region13
    $region12: #{atten_forward.1} parent=1 // pred_region
      _
    $region13: #{atten_forward.1} parent=1 // pred_fallthru
      _
    // Predicated region
    $region14: #{atten_forward.1} parent=1 // pred_check
      _
    $region15: #{atten_forward.1} parent=1 // pred_check_branch
      %20 = sbr.rel (0) target = $region17
    $region16: #{atten_forward.1} parent=1 // pred_region
      _
    $region17: #{atten_forward.1} parent=1 // pred_fallthru
      _
    %v21 = vld [vmem:[%s0] sm:$0xff]
    %v22 = vld [vmem:[%s0 + $0x8] sm:$0xff]
    %v23 = vld [vmem:[%s0 + $0x10] sm:$0xff]
    %v24 = vld [vmem:[%s0 + $0x18] sm:$0xff]
    %v25 = vld [vmem:[%s1] sm:$0xff]
    %v26 = vld [vmem:[%s2] sm:$0x1]
    %v28 = vlaneseq
    %v29 = vshrl.u32 %v28, 7
    %v30 = vsub.s32 0, %v29
    %v31 = vrot.slane %v26, %v30
    %vm33 = vcmask 64512
    %v35 = vsel %vm33, %v21, 0
    %v38 = vsel %vm33, %v22, 0
    %v41 = vsel %vm33, %v23, 0
    %v44 = vsel %vm33, %v24, 0
    %46 = vmatprep.subr.mxu0 0.0
    %47 = vmatpush1.msra.mxu0 %v25
    %48 = vmatprep.subr.mxu0 0.0
    %49 = vmatpush1.msra.mxu0 0.0
    %50 = vmatprep.subr.mxu0 0.0
    %51 = vmatpush1.msra.mxu0 0.0
    %52 = vmatprep.subr.mxu0 0.0
    %53 = vmatpush1.msra.mxu0 0.0
    %54 = vmatprep.subr.mxu0 0.0
    %55 = vmatpush1.msra.mxu0 0.0
    %56 = vmatprep.subr.mxu0 0.0
    %57 = vmatpush1.msra.mxu0 0.0
    %58 = vmatprep.subr.mxu0 0.0
    %59 = vmatpush1.msra.mxu0 0.0
    %60 = vmatprep.subr.mxu0 0.0
    %61 = vmatpush1.msra.mxu0 0.0
    %62 = vmatprep.subr.mxu0 0.0
    %63 = vmatpush1.msra.mxu0 0.0
    %64 = vmatprep.subr.mxu0 0.0
    %65 = vmatpush1.msra.mxu0 0.0
    %66 = vmatprep.subr.mxu0 0.0
    %67 = vmatpush1.msra.mxu0 0.0
    %68 = vmatprep.subr.mxu0 0.0
    %69 = vmatpush1.msra.mxu0 0.0
    %70 = vmatprep.subr.mxu0 0.0
    %71 = vmatpush1.msra.mxu0 0.0
    %72 = vmatprep.subr.mxu0 0.0
    %73 = vmatpush1.msra.mxu0 0.0
    %74 = vmatprep.subr.mxu0 0.0
    %75 = vmatpush1.msra.mxu0 0.0
    %76 = vmatprep.subr.mxu0 0.0
    %77 = vmatpush1.msra.mxu0 0.0
    %78 = vmatprep.subr.mxu0 0.0
    %79 = vmatpush1.msra.mxu0 0.0
    %80 = vmatprep.subr.mxu0 0.0
    %81 = vmatpush1.msra.mxu0 0.0
    %82 = vmatprep.subr.mxu0 0.0
    %83 = vmatpush1.msra.mxu0 0.0
    %84 = vmatprep.subr.mxu0 0.0
    %85 = vmatpush1.msra.mxu0 0.0
    %86 = vmatprep.subr.mxu0 0.0
    %87 = vmatpush1.msra.mxu0 0.0
    %88 = vmatprep.subr.mxu0 0.0
    %89 = vmatpush1.msra.mxu0 0.0
    %90 = vmatprep.subr.mxu0 0.0
    %91 = vmatpush1.msra.mxu0 0.0
    %92 = vmatprep.subr.mxu0 0.0
    %93 = vmatpush1.msra.mxu0 0.0
    %94 = vmatprep.subr.mxu0 0.0
    %95 = vmatpush1.msra.mxu0 0.0
    %96 = vmatprep.subr.mxu0 0.0
    %97 = vmatpush1.msra.mxu0 0.0
    %98 = vmatprep.subr.mxu0 0.0
    %99 = vmatpush1.msra.mxu0 0.0
    %100 = vmatprep.subr.mxu0 0.0
    %101 = vmatpush1.msra.mxu0 0.0
    %102 = vmatprep.subr.mxu0 0.0
    %103 = vmatpush1.msra.mxu0 0.0
    %104 = vmatprep.subr.mxu0 0.0
    %105 = vmatpush1.msra.mxu0 0.0
    %106 = vmatprep.subr.mxu0 0.0
    %107 = vmatpush1.msra.mxu0 0.0
    %108 = vmatprep.subr.mxu0 0.0
    %109 = vmatpush1.msra.mxu0 0.0
    %110 = vmatprep.mubr.f32.mxu0 0.0
    %111 = vmatmul.mubr.f32.gmra.mrb[0].mxu0 %v35
    %v112 = vpop.f32.mrb[0].mxu0
    %v113 = vadd.f32 %v31, %v112
    %v114 = vpop.f32.mrb[0].mxu0
    %115 = vmatprep.mubr.f32.mxu0 0.0
    %116 = vmatmul.mubr.f32.gmra.mrb[0].mxu0 %v38
    %v117 = vpop.f32.mrb[0].mxu0
    %v118 = vadd.f32 %v31, %v117
    %v119 = vpop.f32.mrb[0].mxu0
    %120 = vmatprep.mubr.f32.mxu0 0.0
    %121 = vmatmul.mubr.f32.gmra.mrb[0].mxu0 %v41
    %v122 = vpop.f32.mrb[0].mxu0
    %v123 = vadd.f32 %v31, %v122
    %v124 = vpop.f32.mrb[0].mxu0
    %125 = vmatprep.mubr.f32.mxu0 0.0
    %126 = vmatmul.mubr.f32.gmra.mrb[0].mxu0 %v44
    %v127 = vpop.f32.mrb[0].mxu0
    %v128 = vadd.f32 %v31, %v127
    %v129 = vpop.f32.mrb[0].mxu0
    %130 = vdwg.mxu0
    %v131 = vld [vmem:[%s3] sm:$0xff]
    %v132 = vld [vmem:[%s3 + $0x8] sm:$0xff]
    %135 = vrot.lane.b32.xlu0 %v113, 96
    %v136 = vpop.permute.xlu0 %135
    %137 = vrot.lane.b32.xlu0 %v118, 96
    %v138 = vpop.permute.xlu0 %137
    %vm139 = vcmask 261120
    %v140 = vsel %vm139, %v113, 0
    %v142 = vsel %vm139, %v118, 0
    %v144 = vsel %vm139, %v136, 0
    %v146 = vsel %vm139, %v138, 0
    %148 = vmatprep.subr.mxu0 0.0
    %149 = vmatpush1.xpose.msra.mxu0 %v144
    %150 = vmatprep.subr.mxu0 0.0
    %151 = vmatpush1.xpose.msra.mxu0 %v146
    %152 = vmatprep.subr.mxu0 0.0
    %153 = vmatpush1.xpose.msra.mxu0 0.0
    %154 = vmatprep.subr.mxu0 0.0
    %155 = vmatpush1.xpose.msra.mxu0 0.0
    %156 = vmatprep.subr.mxu0 0.0
    %157 = vmatpush1.xpose.msra.mxu0 0.0
    %158 = vmatprep.subr.mxu0 0.0
    %159 = vmatpush1.xpose.msra.mxu0 0.0
    %160 = vmatprep.subr.mxu0 0.0
    %161 = vmatpush1.xpose.msra.mxu0 0.0
    %162 = vmatprep.subr.mxu0 0.0
    %163 = vmatpush1.xpose.msra.mxu0 0.0
    %164 = vmatprep.subr.mxu0 0.0
    %165 = vmatpush1.xpose.msra.mxu0 0.0
    %166 = vmatprep.subr.mxu0 0.0
    %167 = vmatpush1.xpose.msra.mxu0 0.0
    %168 = vmatprep.subr.mxu0 0.0
    %169 = vmatpush1.xpose.msra.mxu0 0.0
    %170 = vmatprep.subr.mxu0 0.0
    %171 = vmatpush1.xpose.msra.mxu0 0.0
    %172 = vmatprep.subr.mxu0 0.0
    %173 = vmatpush1.xpose.msra.mxu0 0.0
    %174 = vmatprep.subr.mxu0 0.0
    %175 = vmatpush1.xpose.msra.mxu0 0.0
    %176 = vmatprep.subr.mxu0 0.0
    %177 = vmatpush1.xpose.msra.mxu0 0.0
    %178 = vmatprep.subr.mxu0 0.0
    %179 = vmatpush1.xpose.msra.mxu0 0.0
    %180 = vmatprep.subr.mxu0 0.0
    %181 = vmatpush1.xpose.msra.mxu0 0.0
    %182 = vmatprep.subr.mxu0 0.0
    %183 = vmatpush1.xpose.msra.mxu0 0.0
    %184 = vmatprep.subr.mxu0 0.0
    %185 = vmatpush1.xpose.msra.mxu0 0.0
    %186 = vmatprep.subr.mxu0 0.0
    %187 = vmatpush1.xpose.msra.mxu0 0.0
    %188 = vmatprep.subr.mxu0 0.0
    %189 = vmatpush1.xpose.msra.mxu0 0.0
    %190 = vmatprep.subr.mxu0 0.0
    %191 = vmatpush1.xpose.msra.mxu0 0.0
    %192 = vmatprep.subr.mxu0 0.0
    %193 = vmatpush1.xpose.msra.mxu0 0.0
    %194 = vmatprep.subr.mxu0 0.0
    %195 = vmatpush1.xpose.msra.mxu0 0.0
    %196 = vmatprep.subr.mxu0 0.0
    %197 = vmatpush1.xpose.msra.mxu0 0.0
    %198 = vmatprep.subr.mxu0 0.0
    %199 = vmatpush1.xpose.msra.mxu0 0.0
    %200 = vmatprep.subr.mxu0 0.0
    %201 = vmatpush1.xpose.msra.mxu0 0.0
    %202 = vmatprep.subr.mxu0 0.0
    %203 = vmatpush1.xpose.msra.mxu0 0.0
    %204 = vmatprep.subr.mxu0 0.0
    %205 = vmatpush1.xpose.msra.mxu0 0.0
    %206 = vmatprep.subr.mxu0 0.0
    %207 = vmatpush1.xpose.msra.mxu0 0.0
    %208 = vmatprep.subr.mxu0 0.0
    %209 = vmatpush1.xpose.msra.mxu0 0.0
    %210 = vmatprep.subr.mxu0 0.0
    %211 = vmatpush1.xpose.msra.mxu0 0.0
    %212 = vmatprep.mubr.f32.mxu0 0.0
    %213 = vmatmul.mubr.f32.gmra.mrb[0].mxu0 %v140
    %v214 = vpop.f32.mrb[0].mxu0
    %v215 = vadd.f32 0.0, %v214
    %v216 = vpop.f32.mrb[0].mxu0
    %217 = vmatprep.mubr.f32.mxu0 0.0
    %218 = vmatmul.mubr.f32.gmra.mrb[0].mxu0 %v142
    %v219 = vpop.f32.mrb[0].mxu0
    %v220 = vadd.f32 0.0, %v219
    %v221 = vpop.f32.mrb[0].mxu0
    %222 = vdwg.mxu0
    %vm223 = vcmp.gt.f32.partialorder %v131, 0.0
    %vm224 = vcmp.gt.f32.partialorder %v132, 0.0
    %v225 = vsel %vm223, %v215, -9e+15
    %v226 = vsel %vm224, %v220, -9e+15
    %vm227 = vcmask 130048
    %v228 = vsel %vm227, %v225, -inf
    %v229 = vsel %vm227, %v226, -inf
    %v230 = vmax.f32 %v228, %v229
    %v231 = vrot.slane %v230, 4
    %v232 = vmax.f32 %v230, %v231
    %v233 = vrot.slane %v232, 2
    %v234 = vmax.f32 %v232, %v233
    %v235 = vrot.slane %v234, 1
    %v236 = vmax.f32 %v234, %v235
    %v237 = vsub.f32 %v225, %v236
    %v238 = vsub.f32 %v226, %v236
    %v239 = vmul.f32 %v237, 1.442695
    %v240 = vpow.pop %v239
    %v241 = vmul.f32 %v238, 1.442695
    %v242 = vpow.pop %v241
    %v243 = vsel %vm227, %v240, 0.0
    %v244 = vsel %vm227, %v242, 0.0
    %v245 = vadd.f32 %v243, %v244
    %v246 = vrot.slane %v245, 4
    %v247 = vadd.f32 %v245, %v246
    %v248 = vrot.slane %v247, 2
    %v249 = vadd.f32 %v247, %v248
    %v250 = vrot.slane %v249, 1
    %v251 = vadd.f32 %v249, %v250
    %v252 = vrcp.pop %v251
    %v253 = vmul.f32 %v240, %v252
    %v254 = vmul.f32 %v242, %v252
    %255 = vst.msk [vmem:[#allocation4] sm:$0xff] %vm227, %v253
    %256 = vst.msk [vmem:[#allocation4 + $0x8] sm:$0xff] %vm227, %v254
    %257 = vrot.lane.b32.xlu0 %v113, 64
    %v258 = vpop.permute.xlu0 %257
    %259 = vrot.lane.b32.xlu0 %v118, 64
    %v260 = vpop.permute.xlu0 %259
    %v264 = vsel %vm227, %v253, 0
    %v267 = vsel %vm227, %v254, 0
    %269 = vmatprep.subr.mxu0 0.0
    %270 = vmatpush1.msra.mxu0 %v258
    %271 = vmatprep.subr.mxu0 0.0
    %272 = vmatpush1.msra.mxu0 %v260
    %273 = vmatprep.subr.mxu0 0.0
    %274 = vmatpush1.msra.mxu0 0.0
    %275 = vmatprep.subr.mxu0 0.0
    %276 = vmatpush1.msra.mxu0 0.0
    %277 = vmatprep.subr.mxu0 0.0
    %278 = vmatpush1.msra.mxu0 0.0
    %279 = vmatprep.subr.mxu0 0.0
    %280 = vmatpush1.msra.mxu0 0.0
    %281 = vmatprep.subr.mxu0 0.0
    %282 = vmatpush1.msra.mxu0 0.0
    %283 = vmatprep.subr.mxu0 0.0
    %284 = vmatpush1.msra.mxu0 0.0
    %285 = vmatprep.subr.mxu0 0.0
    %286 = vmatpush1.msra.mxu0 0.0
    %287 = vmatprep.subr.mxu0 0.0
    %288 = vmatpush1.msra.mxu0 0.0
    %289 = vmatprep.subr.mxu0 0.0
    %290 = vmatpush1.msra.mxu0 0.0
    %291 = vmatprep.subr.mxu0 0.0
    %292 = vmatpush1.msra.mxu0 0.0
    %293 = vmatprep.subr.mxu0 0.0
    %294 = vmatpush1.msra.mxu0 0.0
    %295 = vmatprep.subr.mxu0 0.0
    %296 = vmatpush1.msra.mxu0 0.0
    %297 = vmatprep.subr.mxu0 0.0
    %298 = vmatpush1.msra.mxu0 0.0
    %299 = vmatprep.subr.mxu0 0.0
    %300 = vmatpush1.msra.mxu0 0.0
    %301 = vmatprep.subr.mxu0 0.0
    %302 = vmatpush1.msra.mxu0 0.0
    %303 = vmatprep.subr.mxu0 0.0
    %304 = vmatpush1.msra.mxu0 0.0
    %305 = vmatprep.subr.mxu0 0.0
    %306 = vmatpush1.msra.mxu0 0.0
    %307 = vmatprep.subr.mxu0 0.0
    %308 = vmatpush1.msra.mxu0 0.0
    %309 = vmatprep.subr.mxu0 0.0
    %310 = vmatpush1.msra.mxu0 0.0
    %311 = vmatprep.subr.mxu0 0.0
    %312 = vmatpush1.msra.mxu0 0.0
    %313 = vmatprep.subr.mxu0 0.0
    %314 = vmatpush1.msra.mxu0 0.0
    %315 = vmatprep.subr.mxu0 0.0
    %316 = vmatpush1.msra.mxu0 0.0
    %317 = vmatprep.subr.mxu0 0.0
    %318 = vmatpush1.msra.mxu0 0.0
    %319 = vmatprep.subr.mxu0 0.0
    %320 = vmatpush1.msra.mxu0 0.0
    %321 = vmatprep.subr.mxu0 0.0
    %322 = vmatpush1.msra.mxu0 0.0
    %323 = vmatprep.subr.mxu0 0.0
    %324 = vmatpush1.msra.mxu0 0.0
    %325 = vmatprep.subr.mxu0 0.0
    %326 = vmatpush1.msra.mxu0 0.0
    %327 = vmatprep.subr.mxu0 0.0
    %328 = vmatpush1.msra.mxu0 0.0
    %329 = vmatprep.subr.mxu0 0.0
    %330 = vmatpush1.msra.mxu0 0.0
    %331 = vmatprep.subr.mxu0 0.0
    %332 = vmatpush1.msra.mxu0 0.0
    %333 = vmatprep.mubr.f32.mxu0 0.0
    %334 = vmatmul.mubr.f32.gmra.mrb[0].mxu0 %v264
    %v335 = vpop.f32.mrb[0].mxu0
    %v336 = vadd.f32 0.0, %v335
    %v337 = vpop.f32.mrb[0].mxu0
    %338 = vmatprep.mubr.f32.mxu0 0.0
    %339 = vmatmul.mubr.f32.gmra.mrb[0].mxu0 %v267
    %v340 = vpop.f32.mrb[0].mxu0
    %v341 = vadd.f32 0.0, %v340
    %v342 = vpop.f32.mrb[0].mxu0
    %343 = vdwg.mxu0
    %v344 = vmul.f32 %v336, 0.044194173
    %v345 = vmul.f32 %v341, 0.044194173
    %346 = vst.msk [vmem:[#allocation2] sm:$0xff] %vm139, %v344
    %347 = vst.msk [vmem:[#allocation2 + $0x8] sm:$0xff] %vm139, %v345
    %350 = vrot.lane.b32.xlu0 %v123, 96
    %v351 = vpop.permute.xlu0 %350
    %352 = vrot.lane.b32.xlu0 %v128, 96
    %v353 = vpop.permute.xlu0 %352
    %v354 = vsel %vm139, %v123, 0
    %v356 = vsel %vm139, %v128, 0
    %v358 = vsel %vm139, %v351, 0
    %v360 = vsel %vm139, %v353, 0
    %362 = vmatprep.subr.mxu0 0.0
    %363 = vmatpush1.xpose.msra.mxu0 %v358
    %364 = vmatprep.subr.mxu0 0.0
    %365 = vmatpush1.xpose.msra.mxu0 %v360
    %366 = vmatprep.subr.mxu0 0.0
    %367 = vmatpush1.xpose.msra.mxu0 0.0
    %368 = vmatprep.subr.mxu0 0.0
    %369 = vmatpush1.xpose.msra.mxu0 0.0
    %370 = vmatprep.subr.mxu0 0.0
    %371 = vmatpush1.xpose.msra.mxu0 0.0
    %372 = vmatprep.subr.mxu0 0.0
    %373 = vmatpush1.xpose.msra.mxu0 0.0
    %374 = vmatprep.subr.mxu0 0.0
    %375 = vmatpush1.xpose.msra.mxu0 0.0
    %376 = vmatprep.subr.mxu0 0.0
    %377 = vmatpush1.xpose.msra.mxu0 0.0
    %378 = vmatprep.subr.mxu0 0.0
    %379 = vmatpush1.xpose.msra.mxu0 0.0
    %380 = vmatprep.subr.mxu0 0.0
    %381 = vmatpush1.xpose.msra.mxu0 0.0
    %382 = vmatprep.subr.mxu0 0.0
    %383 = vmatpush1.xpose.msra.mxu0 0.0
    %384 = vmatprep.subr.mxu0 0.0
    %385 = vmatpush1.xpose.msra.mxu0 0.0
    %386 = vmatprep.subr.mxu0 0.0
    %387 = vmatpush1.xpose.msra.mxu0 0.0
    %388 = vmatprep.subr.mxu0 0.0
    %389 = vmatpush1.xpose.msra.mxu0 0.0
    %390 = vmatprep.subr.mxu0 0.0
    %391 = vmatpush1.xpose.msra.mxu0 0.0
    %392 = vmatprep.subr.mxu0 0.0
    %393 = vmatpush1.xpose.msra.mxu0 0.0
    %394 = vmatprep.subr.mxu0 0.0
    %395 = vmatpush1.xpose.msra.mxu0 0.0
    %396 = vmatprep.subr.mxu0 0.0
    %397 = vmatpush1.xpose.msra.mxu0 0.0
    %398 = vmatprep.subr.mxu0 0.0
    %399 = vmatpush1.xpose.msra.mxu0 0.0
    %400 = vmatprep.subr.mxu0 0.0
    %401 = vmatpush1.xpose.msra.mxu0 0.0
    %402 = vmatprep.subr.mxu0 0.0
    %403 = vmatpush1.xpose.msra.mxu0 0.0
    %404 = vmatprep.subr.mxu0 0.0
    %405 = vmatpush1.xpose.msra.mxu0 0.0
    %406 = vmatprep.subr.mxu0 0.0
    %407 = vmatpush1.xpose.msra.mxu0 0.0
    %408 = vmatprep.subr.mxu0 0.0
    %409 = vmatpush1.xpose.msra.mxu0 0.0
    %410 = vmatprep.subr.mxu0 0.0
    %411 = vmatpush1.xpose.msra.mxu0 0.0
    %412 = vmatprep.subr.mxu0 0.0
    %413 = vmatpush1.xpose.msra.mxu0 0.0
    %414 = vmatprep.subr.mxu0 0.0
    %415 = vmatpush1.xpose.msra.mxu0 0.0
    %416 = vmatprep.subr.mxu0 0.0
    %417 = vmatpush1.xpose.msra.mxu0 0.0
    %418 = vmatprep.subr.mxu0 0.0
    %419 = vmatpush1.xpose.msra.mxu0 0.0
    %420 = vmatprep.subr.mxu0 0.0
    %421 = vmatpush1.xpose.msra.mxu0 0.0
    %422 = vmatprep.subr.mxu0 0.0
    %423 = vmatpush1.xpose.msra.mxu0 0.0
    %424 = vmatprep.subr.mxu0 0.0
    %425 = vmatpush1.xpose.msra.mxu0 0.0
    %426 = vmatprep.mubr.f32.mxu0 0.0
    %427 = vmatmul.mubr.f32.gmra.mrb[0].mxu0 %v354
    %v428 = vpop.f32.mrb[0].mxu0
    %v429 = vadd.f32 0.0, %v428
    %v430 = vpop.f32.mrb[0].mxu0
    %431 = vmatprep.mubr.f32.mxu0 0.0
    %432 = vmatmul.mubr.f32.gmra.mrb[0].mxu0 %v356
    %v433 = vpop.f32.mrb[0].mxu0
    %v434 = vadd.f32 0.0, %v433
    %v435 = vpop.f32.mrb[0].mxu0
    %436 = vdwg.mxu0
    %v437 = vsel %vm223, %v429, -9e+15
    %v438 = vsel %vm224, %v434, -9e+15
    %v439 = vsel %vm227, %v437, -inf
    %v440 = vsel %vm227, %v438, -inf
    %v441 = vmax.f32 %v439, %v440
    %v442 = vrot.slane %v441, 4
    %v443 = vmax.f32 %v441, %v442
    %v444 = vrot.slane %v443, 2
    %v445 = vmax.f32 %v443, %v444
    %v446 = vrot.slane %v445, 1
    %v447 = vmax.f32 %v445, %v446
    %v448 = vsub.f32 %v437, %v447
    %v449 = vsub.f32 %v438, %v447
    %v450 = vmul.f32 %v448, 1.442695
    %v451 = vpow.pop %v450
    %v452 = vmul.f32 %v449, 1.442695
    %v453 = vpow.pop %v452
    %v454 = vsel %vm227, %v451, 0.0
    %v455 = vsel %vm227, %v453, 0.0
    %v456 = vadd.f32 %v454, %v455
    %v457 = vrot.slane %v456, 4
    %v458 = vadd.f32 %v456, %v457
    %v459 = vrot.slane %v458, 2
    %v460 = vadd.f32 %v458, %v459
    %v461 = vrot.slane %v460, 1
    %v462 = vadd.f32 %v460, %v461
    %v463 = vrcp.pop %v462
    %v464 = vmul.f32 %v451, %v463
    %v465 = vmul.f32 %v453, %v463
    %s466 = scalar_lea.vmem [#allocation4], 16
    %467 = vst.msk [vmem:[%s466] sm:$0xff] %vm227, %v464
    %468 = vst.msk [vmem:[%s466 + $0x8] sm:$0xff] %vm227, %v465
    %469 = vrot.lane.b32.xlu0 %v123, 64
    %v470 = vpop.permute.xlu0 %469
    %471 = vrot.lane.b32.xlu0 %v128, 64
    %v472 = vpop.permute.xlu0 %471
    %v476 = vsel %vm227, %v464, 0
    %v479 = vsel %vm227, %v465, 0
    %481 = vmatprep.subr.mxu0 0.0
    %482 = vmatpush1.msra.mxu0 %v470
    %483 = vmatprep.subr.mxu0 0.0
    %484 = vmatpush1.msra.mxu0 %v472
    %485 = vmatprep.subr.mxu0 0.0
    %486 = vmatpush1.msra.mxu0 0.0
    %487 = vmatprep.subr.mxu0 0.0
    %488 = vmatpush1.msra.mxu0 0.0
    %489 = vmatprep.subr.mxu0 0.0
    %490 = vmatpush1.msra.mxu0 0.0
    %491 = vmatprep.subr.mxu0 0.0
    %492 = vmatpush1.msra.mxu0 0.0
    %493 = vmatprep.subr.mxu0 0.0
    %494 = vmatpush1.msra.mxu0 0.0
    %495 = vmatprep.subr.mxu0 0.0
    %496 = vmatpush1.msra.mxu0 0.0
    %497 = vmatprep.subr.mxu0 0.0
    %498 = vmatpush1.msra.mxu0 0.0
    %499 = vmatprep.subr.mxu0 0.0
    %500 = vmatpush1.msra.mxu0 0.0
    %501 = vmatprep.subr.mxu0 0.0
    %502 = vmatpush1.msra.mxu0 0.0
    %503 = vmatprep.subr.mxu0 0.0
    %504 = vmatpush1.msra.mxu0 0.0
    %505 = vmatprep.subr.mxu0 0.0
    %506 = vmatpush1.msra.mxu0 0.0
    %507 = vmatprep.subr.mxu0 0.0
    %508 = vmatpush1.msra.mxu0 0.0
    %509 = vmatprep.subr.mxu0 0.0
    %510 = vmatpush1.msra.mxu0 0.0
    %511 = vmatprep.subr.mxu0 0.0
    %512 = vmatpush1.msra.mxu0 0.0
    %513 = vmatprep.subr.mxu0 0.0
    %514 = vmatpush1.msra.mxu0 0.0
    %515 = vmatprep.subr.mxu0 0.0
    %516 = vmatpush1.msra.mxu0 0.0
    %517 = vmatprep.subr.mxu0 0.0
    %518 = vmatpush1.msra.mxu0 0.0
    %519 = vmatprep.subr.mxu0 0.0
    %520 = vmatpush1.msra.mxu0 0.0
    %521 = vmatprep.subr.mxu0 0.0
    %522 = vmatpush1.msra.mxu0 0.0
    %523 = vmatprep.subr.mxu0 0.0
    %524 = vmatpush1.msra.mxu0 0.0
    %525 = vmatprep.subr.mxu0 0.0
    %526 = vmatpush1.msra.mxu0 0.0
    %527 = vmatprep.subr.mxu0 0.0
    %528 = vmatpush1.msra.mxu0 0.0
    %529 = vmatprep.subr.mxu0 0.0
    %530 = vmatpush1.msra.mxu0 0.0
    %531 = vmatprep.subr.mxu0 0.0
    %532 = vmatpush1.msra.mxu0 0.0
    %533 = vmatprep.subr.mxu0 0.0
    %534 = vmatpush1.msra.mxu0 0.0
    %535 = vmatprep.subr.mxu0 0.0
    %536 = vmatpush1.msra.mxu0 0.0
    %537 = vmatprep.subr.mxu0 0.0
    %538 = vmatpush1.msra.mxu0 0.0
    %539 = vmatprep.subr.mxu0 0.0
    %540 = vmatpush1.msra.mxu0 0.0
    %541 = vmatprep.subr.mxu0 0.0
    %542 = vmatpush1.msra.mxu0 0.0
    %543 = vmatprep.subr.mxu0 0.0
    %544 = vmatpush1.msra.mxu0 0.0
    %545 = vmatprep.mubr.f32.mxu0 0.0
    %546 = vmatmul.mubr.f32.gmra.mrb[0].mxu0 %v476
    %v547 = vpop.f32.mrb[0].mxu0
    %v548 = vadd.f32 0.0, %v547
    %v549 = vpop.f32.mrb[0].mxu0
    %550 = vmatprep.mubr.f32.mxu0 0.0
    %551 = vmatmul.mubr.f32.gmra.mrb[0].mxu0 %v479
    %v552 = vpop.f32.mrb[0].mxu0
    %v553 = vadd.f32 0.0, %v552
    %v554 = vpop.f32.mrb[0].mxu0
    %555 = vdwg.mxu0
    %v556 = vmul.f32 %v548, 0.044194173
    %v557 = vmul.f32 %v553, 0.044194173
    %s558 = scalar_lea.vmem [#allocation2], 16
    %559 = vst.msk [vmem:[%s558] sm:$0xff] %vm139, %v556
    %560 = vst.msk [vmem:[%s558 + $0x8] sm:$0xff] %vm139, %v557
    // Predicated region
    $region18: #{atten_forward.1} parent=1 // pred_check
      _
    $region19: #{atten_forward.1} parent=1 // pred_check_branch
      %562 = sbr.rel (0) target = $region21
    $region20: #{atten_forward.1} parent=1 // pred_region
      %s564 = ssub.s32 512, 512
      %565 = vsyncadd [#allocation3], %s564
      %s566 = sshll.u32 [#allocation2], 4
      %s567 = int_to_ptr.vmem [resolvable:$true] %s566
      %572 = dma.vmem_to_hbm [thread:$0]  %s567, 512, %s4, [#allocation3], 128, 128, 8
    $region21: #{atten_forward.1} parent=1 // pred_fallthru
      _
    // Predicated region
    $region22: #{atten_forward.1} parent=1 // pred_check
      _
    $region23: #{atten_forward.1} parent=1 // pred_check_branch
      %574 = sbr.rel (0) target = $region25
    $region24: #{atten_forward.1} parent=1 // pred_region
      %s576 = ssub.s32 512, 512
      %577 = vsyncadd [#allocation5], %s576
      %s578 = sshll.u32 [#allocation4], 4
      %s579 = int_to_ptr.vmem [resolvable:$true] %s578
      %584 = dma.vmem_to_hbm [thread:$0]  %s579, 512, %s5, [#allocation5], 128, 128, 8
    $region25: #{atten_forward.1} parent=1 // pred_fallthru
      _
    // Predicated region
    $region26: #{atten_forward.1} parent=1 // pred_check
      _
    $region27: #{atten_forward.1} parent=1 // pred_check_branch
      %586 = sbr.rel (0) target = $region29
    $region28: #{atten_forward.1} parent=1 // pred_region
      %587 = dma.done [#allocation3], 512
    $region29: #{atten_forward.1} parent=1 // pred_fallthru
      _
    // Predicated region
    $region30: #{atten_forward.1} parent=1 // pred_check
      _
    $region31: #{atten_forward.1} parent=1 // pred_check_branch
      %589 = sbr.rel (0) target = $region33
    $region32: #{atten_forward.1} parent=1 // pred_region
      %590 = dma.done [#allocation5], 512
    $region33: #{atten_forward.1} parent=1 // pred_fallthru
      _
    %591 = vsyncpa [#allocation3], 1
    %592 = vsyncpa [#allocation5], 1

</llo_original>
